<compile_context>
chip_gen: v6e
topology: v6e:2x2x1
jax: 0.10.0
libtpu: 0.0.40
codegen_flags: <defaults>
</compile_context>

<pallas_src>
import jax
import jax.numpy as jnp
from jax.experimental import pallas as pl
from jax.experimental.pallas import tpu as pltpu

dim_control = 3
dim_observation = 3

_LANE = 128
_BIG_TILE = 32768          # lanes; (3, 32768) f32 = 384 KiB per block
_SMALL_B_THRESHOLD = 1024  # below this, plain XLA is cheaper than a pallas_call


def _round_up(n, m):
    return ((n + m - 1) // m) * m


def controller_kernel(diff_ref, w_ref, b_ref, o_ref):
    # diff_ref: (dim_observation, tile_B) VMEM  -- lane-dense (x - x_target)^T
    # w_ref   : (dim_control * dim_observation,) SMEM  -- row-major torch W[c, k]
    # b_ref   : (dim_control,) SMEM
    # o_ref   : (dim_control, tile_B) VMEM
    d = diff_ref[...].astype(jnp.float32)                 # (dim_obs, tile_B)

    rows = []
    for c in range(dim_control):                          # static unroll, 3x3 = 9 FMAs
        acc = w_ref[c * dim_observation] * d[0:1, :]
        for k in range(1, dim_observation):
            acc = acc + w_ref[c * dim_observation + k] * d[k:k + 1, :]
        rows.append(acc + b_ref[c])

    o_ref[...] = jnp.concatenate(rows, axis=0).astype(o_ref.dtype)


def controller_forward(x, x_target, weight, bias, *,
                       force_pallas=False, lane_dense_output=False):
    """x, x_target: (B, dim_observation); weight: (dim_control, dim_observation);
    bias: (dim_control,).

    Returns Linear(x - x_target):
      (B, dim_control)            if lane_dense_output=False (PyTorch layout)
      (dim_control, B)            if lane_dense_output=True  (lane-dense, no back-transpose)
    """
    B = x.shape[0]

    # ---- Small-batch fast path: let XLA fuse the whole thing (fixed-overhead win).
    if not force_pallas and B < _SMALL_B_THRESHOLD:
        out = (x - x_target) @ weight.T + bias
        return out.T if lane_dense_output else out

    # ---- Tile selection: big lane-dense tiles, but keep >= 2 grid steps when possible
    #      so the "parallel" batch axis can shard across v7x's 2 TensorCores.
    B128 = _round_up(B, _LANE)
    if B128 <= _LANE:
        tile_B = _LANE
    else:
        half = _round_up((B128 + 1) // 2, _LANE)
        tile_B = min(_BIG_TILE, half)
    Bp = _round_up(B, tile_B)
    pad = Bp - B

    # ---- One fused wrapper op: sub + pad + transpose -> lane-dense diff (dim_obs, Bp).
    diff_t = jnp.pad(x - x_target, ((0, pad), (0, 0))).T          # (dim_obs, Bp)

    # Weight/bias as flat SMEM scalars (1-D so SMEM padding stays tiny).
    w_flat = weight.reshape(dim_control * dim_observation)        # (9,)
    b_flat = bias.reshape(dim_control)                            # (3,)

    grid = (Bp // tile_B,)

    cost = pl.CostEstimate(
        flops=Bp * dim_observation * dim_control * 2 + Bp * dim_control,
        transcendentals=0,
        bytes_accessed=(diff_t.dtype.itemsize * dim_observation * Bp      # diff in
                        + x.dtype.itemsize * dim_control * Bp             # out
                        + 4 * (dim_control * dim_observation + dim_control)),
    )

    out_t = pl.pallas_call(
        controller_kernel,
        out_shape=jax.ShapeDtypeStruct((dim_control, Bp), x.dtype),
        grid=grid,
        in_specs=[
            # last dim tile_B is a multiple of 128; leading dim equals full array dim (3)
            pl.BlockSpec((dim_observation, tile_B), lambda i: (0, i)),
            pl.BlockSpec(memory_space=pltpu.SMEM),   # weight, whole array, no per-step DMA
            pl.BlockSpec(memory_space=pltpu.SMEM),   # bias
        ],
        out_specs=pl.BlockSpec((dim_control, tile_B), lambda i: (0, i)),
        compiler_params=pltpu.CompilerParams(
            dimension_semantics=("parallel",),       # shard batch tiles across TCs (v7x)
        ),
        cost_estimate=cost,
    )(diff_t, w_flat, b_flat)

    if lane_dense_output:
        return out_t[:, :B]                          # (dim_control, B), no back-transpose
    # PyTorch-facing layout (B, dim_control); drop lane padding.
    return out_t[:, :B].T


if __name__ == "__main__":
    key = jax.random.PRNGKey(0)
    k_w, k_b, k_x, k_t = jax.random.split(key, 4)

    # Deterministic parameter init (mimics torch.nn.Linear's U(-1/sqrt(in), 1/sqrt(in))).
    bound = 1.0 / (dim_observation ** 0.5)
    weight = jax.random.uniform(k_w, (dim_control, dim_observation),
                                minval=-bound, maxval=bound, dtype=jnp.float32)
    bias = jax.random.uniform(k_b, (dim_control,),
                              minval=-bound, maxval=bound, dtype=jnp.float32)

    B = 8
    x = jax.random.normal(k_x, (B, dim_observation), dtype=jnp.float32)
    x_target = jax.random.normal(k_t, (B, dim_observation), dtype=jnp.float32)

    # Pure-JAX reference (torch.nn.Linear semantics: y = z @ W.T + b).
    ref = (x - x_target) @ weight.T + bias

    # 1) Exercise the Pallas kernel (force past the small-batch fast path).
    out = controller_forward(x, x_target, weight, bias, force_pallas=True)
    out = jax.block_until_ready(out)
    assert out.shape == (B, dim_control)
    assert jnp.allclose(out, ref, atol=1e-5, rtol=1e-5)

    # 2) Lane-dense output variant of the kernel path.
    out_ld = controller_forward(x, x_target, weight, bias,
                                force_pallas=True, lane_dense_output=True)
    out_ld = jax.block_until_ready(out_ld)
    assert out_ld.shape == (dim_control, B)
    assert jnp.allclose(out_ld.T, ref, atol=1e-5, rtol=1e-5)

    # 3) Default small-batch fast path (pure XLA) must agree too.
    out_fast = jax.block_until_ready(controller_forward(x, x_target, weight, bias))
    assert jnp.allclose(out_fast, ref, atol=1e-5, rtol=1e-5)

    print("KERNEL_OK")
</pallas_src>

<mosaic_0001>
module attributes {stable_mosaic.version = 11 : i64} {
  func.func @controller_kernel(%arg0: i32, %arg1: memref<3x128xf32, #tpu.memory_space<vmem>>, %arg2: memref<9xf32, #tpu.memory_space<smem>>, %arg3: memref<3xf32, #tpu.memory_space<smem>>, %arg4: memref<3x128xf32, #tpu.memory_space<vmem>>) attributes {dimension_semantics = [#tpu.dimension_semantics<parallel>], iteration_bounds = array<i64: 1>, scalar_prefetch = 0 : i64, scratch_operands = 0 : i64, tpu.core_type = #tpu.core_type<tc>, window_params = [{transform_indices = @transform_0, window_bounds = array<i64: 3, 128>}, {transform_indices = @transform_1, window_bounds = array<i64: 9>}, {transform_indices = @transform_2, window_bounds = array<i64: 3>}, {transform_indices = @transform_3, window_bounds = array<i64: 3, 128>}]} {
    %c0 = arith.constant 0 : index
    %c0_0 = arith.constant 0 : index
    %0 = vector.load %arg1[%c0, %c0_0] : memref<3x128xf32, #tpu.memory_space<vmem>>, vector<3x128xf32>
    %c0_1 = arith.constant 0 : index
    %1 = memref.load %arg2[%c0_1] : memref<9xf32, #tpu.memory_space<smem>>
    %2 = vector.extract_strided_slice %0 {offsets = [0, 0], sizes = [1, 128], strides = [1, 1]} : vector<3x128xf32> to vector<1x128xf32>
    %3 = vector.broadcast %1 : f32 to vector<1x128xf32>
    %4 = arith.mulf %3, %2 : vector<1x128xf32>
    %c1 = arith.constant 1 : index
    %5 = memref.load %arg2[%c1] : memref<9xf32, #tpu.memory_space<smem>>
    %6 = vector.extract_strided_slice %0 {offsets = [1, 0], sizes = [1, 128], strides = [1, 1]} : vector<3x128xf32> to vector<1x128xf32>
    %7 = vector.broadcast %5 : f32 to vector<1x128xf32>
    %8 = arith.mulf %7, %6 : vector<1x128xf32>
    %9 = arith.addf %4, %8 : vector<1x128xf32>
    %c2 = arith.constant 2 : index
    %10 = memref.load %arg2[%c2] : memref<9xf32, #tpu.memory_space<smem>>
    %11 = vector.extract_strided_slice %0 {offsets = [2, 0], sizes = [1, 128], strides = [1, 1]} : vector<3x128xf32> to vector<1x128xf32>
    %12 = vector.broadcast %10 : f32 to vector<1x128xf32>
    %13 = arith.mulf %12, %11 : vector<1x128xf32>
    %14 = arith.addf %9, %13 : vector<1x128xf32>
    %c0_2 = arith.constant 0 : index
    %15 = memref.load %arg3[%c0_2] : memref<3xf32, #tpu.memory_space<smem>>
    %16 = vector.broadcast %15 : f32 to vector<1x128xf32>
    %17 = arith.addf %14, %16 : vector<1x128xf32>
    %c3 = arith.constant 3 : index
    %18 = memref.load %arg2[%c3] : memref<9xf32, #tpu.memory_space<smem>>
    %19 = vector.extract_strided_slice %0 {offsets = [0, 0], sizes = [1, 128], strides = [1, 1]} : vector<3x128xf32> to vector<1x128xf32>
    %20 = vector.broadcast %18 : f32 to vector<1x128xf32>
    %21 = arith.mulf %20, %19 : vector<1x128xf32>
    %c4 = arith.constant 4 : index
    %22 = memref.load %arg2[%c4] : memref<9xf32, #tpu.memory_space<smem>>
    %23 = vector.extract_strided_slice %0 {offsets = [1, 0], sizes = [1, 128], strides = [1, 1]} : vector<3x128xf32> to vector<1x128xf32>
    %24 = vector.broadcast %22 : f32 to vector<1x128xf32>
    %25 = arith.mulf %24, %23 : vector<1x128xf32>
    %26 = arith.addf %21, %25 : vector<1x128xf32>
    %c5 = arith.constant 5 : index
    %27 = memref.load %arg2[%c5] : memref<9xf32, #tpu.memory_space<smem>>
    %28 = vector.extract_strided_slice %0 {offsets = [2, 0], sizes = [1, 128], strides = [1, 1]} : vector<3x128xf32> to vector<1x128xf32>
    %29 = vector.broadcast %27 : f32 to vector<1x128xf32>
    %30 = arith.mulf %29, %28 : vector<1x128xf32>
    %31 = arith.addf %26, %30 : vector<1x128xf32>
    %c1_3 = arith.constant 1 : index
    %32 = memref.load %arg3[%c1_3] : memref<3xf32, #tpu.memory_space<smem>>
    %33 = vector.broadcast %32 : f32 to vector<1x128xf32>
    %34 = arith.addf %31, %33 : vector<1x128xf32>
    %c6 = arith.constant 6 : index
    %35 = memref.load %arg2[%c6] : memref<9xf32, #tpu.memory_space<smem>>
    %36 = vector.extract_strided_slice %0 {offsets = [0, 0], sizes = [1, 128], strides = [1, 1]} : vector<3x128xf32> to vector<1x128xf32>
    %37 = vector.broadcast %35 : f32 to vector<1x128xf32>
    %38 = arith.mulf %37, %36 : vector<1x128xf32>
    %c7 = arith.constant 7 : index
    %39 = memref.load %arg2[%c7] : memref<9xf32, #tpu.memory_space<smem>>
    %40 = vector.extract_strided_slice %0 {offsets = [1, 0], sizes = [1, 128], strides = [1, 1]} : vector<3x128xf32> to vector<1x128xf32>
    %41 = vector.broadcast %39 : f32 to vector<1x128xf32>
    %42 = arith.mulf %41, %40 : vector<1x128xf32>
    %43 = arith.addf %38, %42 : vector<1x128xf32>
    %c8 = arith.constant 8 : index
    %44 = memref.load %arg2[%c8] : memref<9xf32, #tpu.memory_space<smem>>
    %45 = vector.extract_strided_slice %0 {offsets = [2, 0], sizes = [1, 128], strides = [1, 1]} : vector<3x128xf32> to vector<1x128xf32>
    %46 = vector.broadcast %44 : f32 to vector<1x128xf32>
    %47 = arith.mulf %46, %45 : vector<1x128xf32>
    %48 = arith.addf %43, %47 : vector<1x128xf32>
    %c2_4 = arith.constant 2 : index
    %49 = memref.load %arg3[%c2_4] : memref<3xf32, #tpu.memory_space<smem>>
    %50 = vector.broadcast %49 : f32 to vector<1x128xf32>
    %51 = arith.addf %48, %50 : vector<1x128xf32>
    %52 = tpu.concatenate %17, %34, %51 in 0 : vector<1x128xf32>, vector<1x128xf32>, vector<1x128xf32> -> vector<3x128xf32>
    %c0_5 = arith.constant 0 : index
    %c0_6 = arith.constant 0 : index
    %53 = vector.load %arg4[%c0_5, %c0_6] : memref<3x128xf32, #tpu.memory_space<vmem>>, vector<3x128xf32>
    tpu.vector_store %arg4[%c0_5, %c0_6], %52 {strides = array<i32>} : memref<3x128xf32, #tpu.memory_space<vmem>>, vector<3x128xf32>,
    return
  }
  func.func @transform_0(%arg0: i32) -> (i32, i32) {
    %c0_i32 = arith.constant 0 : i32
    %c0_i32_0 = arith.constant 0 : i32
    return %c0_i32, %arg0 : i32, i32
  }
  func.func @transform_1(%arg0: i32) -> i32 {
    %c0_i32 = arith.constant 0 : i32
    %c0_i32_0 = arith.constant 0 : i32
    return %c0_i32 : i32
  }
  func.func @transform_2(%arg0: i32) -> i32 {
    %c0_i32 = arith.constant 0 : i32
    %c0_i32_0 = arith.constant 0 : i32
    return %c0_i32 : i32
  }
  func.func @transform_3(%arg0: i32) -> (i32, i32) {
    %c0_i32 = arith.constant 0 : i32
    %c0_i32_0 = arith.constant 0 : i32
    return %c0_i32, %arg0 : i32, i32
  }
}

</mosaic_0001>

<llo_original>
// kernel: tpu_custom_call.1
$region0: #{tpu_custom_call.1}
  #allocation0 [shape = 'u32[]', space=smem, size = 0x4, offset = 0x4, fixed_abs, tag = 'smem constant byte address 0x4 - core index']
  #allocation1 [shape = 'u32[144,128]{1,0:T(1,128)}', space=vmem, size = 0x12000, scoped, tag = 'internal scratch']
  %s0 = inlined_call_operand.hbm [shape: f32[3,128], index: 0, kind: input, shape index: {}]
  %s1 = inlined_call_operand.vmem [shape: f32[9], index: 1, kind: input, shape index: {}]
  %s2 = inlined_call_operand.vmem [shape: f32[3], index: 2, kind: input, shape index: {}]
  %s3 = inlined_call_operand.hbm [shape: f32[3,128], index: 3, kind: output, shape index: {}]
  %s4 = sld [smem:[#allocation0]]
  $region34: #{tpu_custom_call.1} parent=0
    _
  %s6 = ssub.s32 1, %s4
  %s7 = scalar_select 0, %s6, %s4
  $region1: #{tpu_custom_call.1} parent=0
    #allocation2 [shape = 'u8[2048]{0}', space=vmem, size = 0x800, scoped, tag = 'input window, operand 0, single buffered']
    #allocation3 [shape = 's32[1]{0}', space=sflag, size = 0x4, scoped, tag = 'scoped memory for tpu_custom_call.1']
    #allocation4 [shape = 's32[1]{0}', space=sflag, size = 0x4, scoped, tag = 'scoped memory for tpu_custom_call.1']
    #allocation5 [shape = 's32[1]{0}', space=sflag, size = 0x4, scoped, tag = 'scoped memory for tpu_custom_call.1']
    #allocation6 [shape = 'u8[512]{0}', space=smem, size = 0x200, scoped, tag = 'input window, operand 1, single buffered']
    #allocation7 [shape = 'u8[512]{0}', space=smem, size = 0x200, scoped, tag = 'input window, operand 2, single buffered']
    #allocation8 [shape = 's32[1]{0}', space=sflag, size = 0x4, scoped, tag = 'scoped memory for tpu_custom_call.1']
    #allocation9 [shape = 'u8[2048]{0}', space=vmem, size = 0x800, scoped, tag = 'output window, operand 0, single buffered']
    %8 = vsyncpa [#allocation3], 0
    %9 = vsyncpa [#allocation5], 0
    %10 = vsyncpa [#allocation8], 0
    %11 = vsyncpa [#allocation4], 0
    // Predicated region
    $region2: #{tpu_custom_call.1} parent=1 // pred_check
      _
    $region3: #{tpu_custom_call.1} parent=1 // pred_check_branch
      %13 = sbr.rel (0) target = $region5
    $region4: #{tpu_custom_call.1} parent=1 // pred_region
      %s15 = ssub.s32 64, 64
      %16 = vsyncadd [#allocation3], %s15
      %s18 = sshll.u32 [#allocation2], 4
      %s19 = int_to_ptr.vmem [resolvable:$true] %s18
      %21 = dma.hbm_to_vmem [thread:$0]  %s0, 64, %s19, [#allocation3]
    $region5: #{tpu_custom_call.1} parent=1 // pred_fallthru
      _
    // Predicated region
    $region6: #{tpu_custom_call.1} parent=1 // pred_check
      _
    $region7: #{tpu_custom_call.1} parent=1 // pred_check_branch
      %23 = sbr.rel (0) target = $region9
    $region8: #{tpu_custom_call.1} parent=1 // pred_region
      %s25 = ssub.s32 16, 16
      %26 = vsyncadd [#allocation5], %s25
      %s28 = sshll.u32 %s1, 4
      %s29 = int_to_ptr.vmem [resolvable:$true] %s28
      %31 = dma.vmem_to_smem %s29, 16, [#allocation6], [#allocation5]
    $region9: #{tpu_custom_call.1} parent=1 // pred_fallthru
      _
    // Predicated region
    $region10: #{tpu_custom_call.1} parent=1 // pred_check
      _
    $region11: #{tpu_custom_call.1} parent=1 // pred_check_branch
      %33 = sbr.rel (0) target = $region13
    $region12: #{tpu_custom_call.1} parent=1 // pred_region
      %s35 = ssub.s32 16, 16
      %36 = vsyncadd [#allocation8], %s35
      %s38 = sshll.u32 %s2, 4
      %s39 = int_to_ptr.vmem [resolvable:$true] %s38
      %41 = dma.vmem_to_smem %s39, 16, [#allocation7], [#allocation8]
    $region13: #{tpu_custom_call.1} parent=1 // pred_fallthru
      _
    // Predicated region
    $region14: #{tpu_custom_call.1} parent=1 // pred_check
      _
    $region15: #{tpu_custom_call.1} parent=1 // pred_check_branch
      %43 = sbr.rel (0) target = $region17
    $region16: #{tpu_custom_call.1} parent=1 // pred_region
      %44 = dma.done [#allocation3], 64
    $region17: #{tpu_custom_call.1} parent=1 // pred_fallthru
      _
    // Predicated region
    $region18: #{tpu_custom_call.1} parent=1 // pred_check
      _
    $region19: #{tpu_custom_call.1} parent=1 // pred_check_branch
      %46 = sbr.rel (0) target = $region21
    $region20: #{tpu_custom_call.1} parent=1 // pred_region
      %47 = dma.done [#allocation5], 16
    $region21: #{tpu_custom_call.1} parent=1 // pred_fallthru
      _
    // Predicated region
    $region22: #{tpu_custom_call.1} parent=1 // pred_check
      _
    $region23: #{tpu_custom_call.1} parent=1 // pred_check_branch
      %49 = sbr.rel (0) target = $region25
    $region24: #{tpu_custom_call.1} parent=1 // pred_region
      %50 = dma.done [#allocation8], 16
    $region25: #{tpu_custom_call.1} parent=1 // pred_fallthru
      _
    %51 = sfence
    %v52 = vld [vmem:[#allocation2] sm:$0x7]
    %s53 = sld [smem:[#allocation6]]
    %v54 = vstv %s53
    %v55 = vmul.f32 %v54, %v52
    %s56 = sld [smem:[#allocation6 + $0x1]]
    %v57 = vstv %s56
    %v58 = vmul.f32 %v57, %v52
    %v60 = vrot.slane %v58, 1
    %v62 = vadd.f32 %v55, %v60
    %s63 = sld [smem:[#allocation6 + $0x2]]
    %v64 = vstv %s63
    %v65 = vmul.f32 %v64, %v52
    %v67 = vrot.slane %v65, 2
    %v69 = vadd.f32 %v62, %v67
    %s70 = sld [smem:[#allocation7]]
    %v71 = vstv %s70
    %v72 = vadd.f32 %v69, %v71
    %s73 = sld [smem:[#allocation6 + $0x3]]
    %v74 = vstv %s73
    %v75 = vmul.f32 %v74, %v52
    %s76 = sld [smem:[#allocation6 + $0x4]]
    %v77 = vstv %s76
    %v78 = vmul.f32 %v77, %v52
    %v80 = vrot.slane %v78, 1
    %v82 = vadd.f32 %v75, %v80
    %s83 = sld [smem:[#allocation6 + $0x5]]
    %v84 = vstv %s83
    %v85 = vmul.f32 %v84, %v52
    %v87 = vrot.slane %v85, 2
    %v89 = vadd.f32 %v82, %v87
    %s90 = sld [smem:[#allocation7 + $0x1]]
    %v91 = vstv %s90
    %v92 = vadd.f32 %v89, %v91
    %s93 = sld [smem:[#allocation6 + $0x6]]
    %v94 = vstv %s93
    %v95 = vmul.f32 %v94, %v52
    %s96 = sld [smem:[#allocation6 + $0x7]]
    %v97 = vstv %s96
    %v98 = vmul.f32 %v97, %v52
    %v100 = vrot.slane %v98, 1
    %v102 = vadd.f32 %v95, %v100
    %s103 = sld [smem:[#allocation6 + $0x8]]
    %v104 = vstv %s103
    %v105 = vmul.f32 %v104, %v52
    %v107 = vrot.slane %v105, 2
    %v109 = vadd.f32 %v102, %v107
    %s110 = sld [smem:[#allocation7 + $0x2]]
    %v111 = vstv %s110
    %v112 = vadd.f32 %v109, %v111
    %v114 = vrot.slane %v92, 7
    %v117 = vrot.slane %v112, 6
    %vm119 = vcmask 1040384
    %v120 = vsel %vm119, %v72, %v114
    %vm121 = vcmask 1041408
    %v122 = vsel %vm121, %v120, %v117
    %123 = vst [vmem:[#allocation9] sm:$0x7] %v122
    // Predicated region
    $region26: #{tpu_custom_call.1} parent=1 // pred_check
      _
    $region27: #{tpu_custom_call.1} parent=1 // pred_check_branch
      %125 = sbr.rel (0) target = $region29
    $region28: #{tpu_custom_call.1} parent=1 // pred_region
      %s127 = ssub.s32 64, 64
      %128 = vsyncadd [#allocation4], %s127
      %s130 = sshll.u32 [#allocation9], 4
      %s131 = int_to_ptr.vmem [resolvable:$true] %s130
      %133 = dma.vmem_to_hbm [thread:$0]  %s131, 64, %s3, [#allocation4]
    $region29: #{tpu_custom_call.1} parent=1 // pred_fallthru
      _
    // Predicated region
    $region30: #{tpu_custom_call.1} parent=1 // pred_check
      _
    $region31: #{tpu_custom_call.1} parent=1 // pred_check_branch
      %135 = sbr.rel (0) target = $region33
    $region32: #{tpu_custom_call.1} parent=1 // pred_region
      %136 = dma.done [#allocation4], 64
    $region33: #{tpu_custom_call.1} parent=1 // pred_fallthru
      _
    %137 = vsyncpa [#allocation3], 1
    %138 = vsyncpa [#allocation4], 1
    %139 = vsyncpa [#allocation5], 1
    %140 = vsyncpa [#allocation8], 1

</llo_original>
